<compile_context>
chip_gen: v7x
topology: tpu7x:2x2x1
jax: 0.10.0
libtpu: 0.0.40
codegen_flags: <defaults>
</compile_context>

<pallas_src>
import functools

import jax
import jax.numpy as jnp
from jax.experimental import pallas as pl
from jax.experimental.pallas import tpu as pltpu


def _patchify_kernel(x_ref, o_ref, *, window, pad, stride, patch_len, patch_num):
    # x_ref: (TB, W, C)      o_ref: (TB, C, patch_num * patch_len)
    tb, _, c = x_ref.shape
    x = x_ref[...]                                   # single batched load
    xt = jnp.transpose(x, (0, 2, 1))                 # (TB, C, W): time -> lane axis

    if pad > 0:
        # ReplicationPad1d((0, stride)): repeat last time step `pad` times.
        # Lane-axis concat after the transpose (avoids a whole-window sublane
        # concat at a non-multiple-of-8 offset).
        last = xt[:, :, window - 1:window]           # (TB, C, 1)
        xt = jnp.concatenate(
            [xt, jnp.broadcast_to(last, (tb, c, pad))], axis=-1)  # (TB, C, W+pad)

    if patch_len % stride == 0:
        # Slab construction: out[..., p, j*stride + s] = xt[..., (p+j)*stride + s]
        # -> only k shifted views of the stride-blocked time axis.
        k = patch_len // stride
        need = (patch_num + k - 1) * stride          # == (patch_num-1)*stride + patch_len
        blocks = xt[:, :, :need].reshape(tb, c, patch_num + k - 1, stride)
        slabs = [blocks[:, :, j:j + patch_num, :] for j in range(k)]
        out = jnp.concatenate(slabs, axis=-1)        # (TB, C, P, patch_len)
        o_ref[...] = out.reshape(tb, c, patch_num * patch_len)
    else:
        # Rare fallback (patch_len not a multiple of stride): static lane slices,
        # still batched over the whole block and one lane-dense store.
        patches = [xt[:, :, p * stride: p * stride + patch_len]
                   for p in range(patch_num)]
        o_ref[...] = jnp.concatenate(patches, axis=-1)


def _vmem_limit_bytes():
    # Generation-aware scoped-VMEM limit: ~3/4 of physical per-core VMEM,
    # capped at 96 MiB (so ~48 MiB on v7x's 64 MiB, ~96 MiB on v5e/v6e's 128 MiB).
    try:
        cap = int(pltpu.get_tpu_info().vmem_capacity_bytes)
    except Exception:
        cap = 64 * 1024 * 1024                       # v7x physical: safe everywhere
    return int(min(cap * 3 // 4, 96 * 1024 * 1024))


def patchify1d(x, *, patch_len, stride, padding_patch, batch_tile=None):
    """x: (B, window_size, C) -> (B, C, patch_num, patch_len)."""
    B, W, C = x.shape
    pad = stride if padding_patch else 0
    L = W + pad
    if patch_len > L:
        raise ValueError(
            f"patch_len={patch_len} exceeds padded window length {L}")
    patch_num = (L - patch_len) // stride + 1        # == module's self.patch_num

    vmem_limit = _vmem_limit_bytes()

    if batch_tile is None:
        per_batch = (W * C + C * patch_num * patch_len) * x.dtype.itemsize
        # ~6x headroom on the (in + out) block: 2x pipeline double-buffering
        # plus in-kernel transpose / pad / slab temporaries.
        budget = max(per_batch, vmem_limit // 6)
        batch_tile = max(1, min(B, budget // per_batch))
        if B >= 2:
            # Keep >= 2 grid steps: shards the batch axis across v7x's two
            # TensorCores and lets the DMA pipeline overlap steps.
            batch_tile = min(batch_tile, -(-B // 2))
    TB = int(batch_tile)

    kernel = functools.partial(
        _patchify_kernel, window=W, pad=pad, stride=stride,
        patch_len=patch_len, patch_num=patch_num)

    flat = pl.pallas_call(
        kernel,
        out_shape=jax.ShapeDtypeStruct((B, C, patch_num * patch_len), x.dtype),
        grid=(pl.cdiv(B, TB),),                      # no B % TB requirement
        in_specs=[pl.BlockSpec((TB, W, C), lambda b: (b, 0, 0))],
        out_specs=pl.BlockSpec((TB, C, patch_num * patch_len),
                               lambda b: (b, 0, 0)),
        compiler_params=pltpu.CompilerParams(
            dimension_semantics=("parallel",),
            vmem_limit_bytes=vmem_limit),
    )(x)
    # (B, C, P*PL) -> (B, C, P, PL): free row-major reshape, no data movement.
    return flat.reshape(B, C, patch_num, patch_len)


def _reference(x, *, patch_len, stride, padding_patch):
    # Pure-JAX mirror of the PyTorch forward (permute + ReplicationPad1d + unfold).
    xt = jnp.transpose(x, (0, 2, 1))                 # (B, C, W)
    if padding_patch:
        xt = jnp.concatenate(
            [xt, jnp.repeat(xt[:, :, -1:], stride, axis=-1)], axis=-1)
    L = xt.shape[-1]
    P = (L - patch_len) // stride + 1
    idx = jnp.arange(P)[:, None] * stride + jnp.arange(patch_len)[None, :]
    return xt[:, :, idx]                             # (B, C, P, patch_len)


if __name__ == "__main__":
    key = jax.random.PRNGKey(0)

    # --- small config matching the module: batch=2, window_size=16, channels=4
    B, W, C = 2, 16, 4
    patch_len, stride = 8, 4
    x = jax.random.normal(key, (B, W, C), dtype=jnp.float32)

    # padding_patch=True branch (ReplicationPad1d + unfold)
    out = jax.block_until_ready(
        patchify1d(x, patch_len=patch_len, stride=stride, padding_patch=True))
    ref = _reference(x, patch_len=patch_len, stride=stride, padding_patch=True)
    assert out.shape == (B, C, (W + stride - patch_len) // stride + 1, patch_len)
    assert jnp.array_equal(out, ref), "mismatch (padding_patch=True)"

    # padding_patch=False branch (pure unfold)
    out2 = jax.block_until_ready(
        patchify1d(x, patch_len=patch_len, stride=stride, padding_patch=False))
    ref2 = _reference(x, patch_len=patch_len, stride=stride, padding_patch=False)
    assert out2.shape == (B, C, (W - patch_len) // stride + 1, patch_len)
    assert jnp.array_equal(out2, ref2), "mismatch (padding_patch=False)"

    # --- odd batch: exercises cdiv grid with a partial last block (TB=3, grid=2)
    B2, W2, C2 = 5, 32, 8
    x2 = jax.random.normal(jax.random.PRNGKey(1), (B2, W2, C2), dtype=jnp.float32)
    out3 = jax.block_until_ready(
        patchify1d(x2, patch_len=8, stride=2, padding_patch=True))
    ref3 = _reference(x2, patch_len=8, stride=2, padding_patch=True)
    assert out3.shape == ref3.shape
    assert jnp.array_equal(out3, ref3), "mismatch (odd batch / partial block)"

    print("KERNEL_OK")
</pallas_src>

<mosaic_0001>
module attributes {stable_mosaic.version = 11 : i64} {
  func.func @_patchify_kernel(%arg0: i32, %arg1: memref<1x16x4xf32, #tpu.memory_space<vmem>>, %arg2: memref<1x4x32xf32, #tpu.memory_space<vmem>>) attributes {dimension_semantics = [#tpu.dimension_semantics<parallel>], iteration_bounds = array<i64: 2>, scalar_prefetch = 0 : i64, scratch_operands = 0 : i64, tpu.core_type = #tpu.core_type<tc>, window_params = [{transform_indices = @transform_0, window_bounds = array<i64: 1, 16, 4>}, {transform_indices = @transform_1, window_bounds = array<i64: 1, 4, 32>}]} {
    %c0 = arith.constant 0 : index
    %c0_0 = arith.constant 0 : index
    %c0_1 = arith.constant 0 : index
    %0 = vector.load %arg1[%c0, %c0_0, %c0_1] : memref<1x16x4xf32, #tpu.memory_space<vmem>>, vector<1x16x4xf32>
    %1 = tpu.transpose %0, [0, 2, 1] : vector<1x16x4xf32> -> vector<1x4x16xf32>
    %2 = vector.extract_strided_slice %1 {offsets = [0, 0, 15], sizes = [1, 4, 1], strides = [1, 1, 1]} : vector<1x4x16xf32> to vector<1x4x1xf32>
    %3 = vector.shape_cast %2 : vector<1x4x1xf32> to vector<1x4x1xf32>
    %4 = vector.broadcast %3 : vector<1x4x1xf32> to vector<1x4x4xf32>
    %5 = tpu.concatenate %1, %4 in 2 : vector<1x4x16xf32>, vector<1x4x4xf32> -> vector<1x4x20xf32>
    %6 = vector.shape_cast %5 : vector<1x4x20xf32> to vector<1x4x5x4xf32>
    %7 = vector.extract_strided_slice %6 {offsets = [0, 0, 0, 0], sizes = [1, 4, 4, 4], strides = [1, 1, 1, 1]} : vector<1x4x5x4xf32> to vector<1x4x4x4xf32>
    %8 = vector.extract_strided_slice %6 {offsets = [0, 0, 1, 0], sizes = [1, 4, 4, 4], strides = [1, 1, 1, 1]} : vector<1x4x5x4xf32> to vector<1x4x4x4xf32>
    %9 = tpu.concatenate %7, %8 in 3 : vector<1x4x4x4xf32>, vector<1x4x4x4xf32> -> vector<1x4x4x8xf32>
    %10 = vector.shape_cast %9 : vector<1x4x4x8xf32> to vector<1x4x32xf32>
    %c0_2 = arith.constant 0 : index
    %c0_3 = arith.constant 0 : index
    %c0_4 = arith.constant 0 : index
    %11 = vector.load %arg2[%c0_2, %c0_3, %c0_4] : memref<1x4x32xf32, #tpu.memory_space<vmem>>, vector<1x4x32xf32>
    tpu.vector_store %arg2[%c0_2, %c0_3, %c0_4], %10 {strides = array<i32>} : memref<1x4x32xf32, #tpu.memory_space<vmem>>, vector<1x4x32xf32>,
    return
  }
  func.func @transform_0(%arg0: i32) -> (i32, i32, i32) {
    %c0_i32 = arith.constant 0 : i32
    %c0_i32_0 = arith.constant 0 : i32
    %c0_i32_1 = arith.constant 0 : i32
    return %arg0, %c0_i32, %c0_i32_0 : i32, i32, i32
  }
  func.func @transform_1(%arg0: i32) -> (i32, i32, i32) {
    %c0_i32 = arith.constant 0 : i32
    %c0_i32_0 = arith.constant 0 : i32
    %c0_i32_1 = arith.constant 0 : i32
    return %arg0, %c0_i32, %c0_i32_0 : i32, i32, i32
  }
}

</mosaic_0001>

<llo_original>
// kernel: tpu_custom_call.1
$region0: #{tpu_custom_call.1}
  #allocation0 [shape = 'u32[]', space=smem, size = 0x4, offset = 0x4, fixed_abs, tag = 'smem constant byte address 0x4 - core index']
  #allocation1 [shape = 'u32[144,128]{1,0:T(1,128)}', space=vmem, size = 0x12000, scoped, tag = 'internal scratch']
  %s0 = inlined_call_operand.vmem [shape: f32[2,16,4], index: 0, kind: input, shape index: {}]
  %s1 = inlined_call_operand.hbm [shape: f32[2,4,32], index: 1, kind: output, shape index: {}]
  %s2 = sld [smem:[#allocation0]]
  $region37: #{tpu_custom_call.1} parent=0
    _
  %s4 = ssub.s32 1, %s2
  %s5 = scalar_select 0, %s4, %s2
  $region1: #{tpu_custom_call.1} parent=0
    #allocation2 [shape = 'u8[4096]{0}', space=vmem, size = 0x1000, scoped, tag = 'output window, operand 0']
    #allocation3 [shape = 's32[2]{0}', space=sflag, size = 0x8, scoped, tag = 'scoped memory for tpu_custom_call.1']
    %6 = vsyncpa [#allocation3], 0
    %s7 = scalar_lea.sflag [#allocation3], 1
    %8 = vsyncpa %s7, 0
    loop: start=0, step=1, limit=4
    $region2: #{tpu_custom_call.1} parent=1 // loop_pre_header
      _
    $region3: #{tpu_custom_call.1} parent=1 // loop_header
      %s10 = sphi 0, %s14
      %p11 = scmp.ge.s32.totalorder %s10, 4
      %s20 = sphi 0, %s22
      %s23 = sphi 0, %s20
      %s24 = sphi 0, %s23
      %s40 = sphi 0, %s24
      %s46 = sphi 0, %s48
      %s49 = sphi 0, %s46
      %s50 = sphi 0, %s49
      %s66 = sphi 0, %s50
    $region4: #{tpu_custom_call.1} parent=1 // loop_header_branch
      %13 = sbr.rel (%p11) target = $region8
    $region5: #{tpu_custom_call.1} parent=1 // loop_body
      %s15 = ssub.s32 %s10, 1
      %s16 = ssub.s32 %s10, 2
      %s17 = sadd.s32 %s10, 1
      %s18 = ssub.s32 %s10, %s17
      %p19 = scmp.eq.s32.totalorder %s18, 0
      %s21 = sadd.s32 %s20, 1
      %s22 = scalar_select %p19, %s20, %s21
      %p25 = pneg %p19
      %p26 = scmp.eq.s32.totalorder %s10, 1
      %p27 = por %p25, %p26
      %p28 = scmp.ne.s32.totalorder %s20, %s23
      %p29 = scmp.eq.s32.totalorder %s10, 0
      %p30 = por %p28, %p29
      %p31 = scmp.ne.s32.totalorder %s20, %s23
      %p32 = scmp.eq.s32.totalorder %s15, 1
      %p33 = por %p31, %p32
      %p34 = scmp.ne.s32.totalorder %s23, %s24
      %p35 = scmp.eq.s32.totalorder %s15, 0
      %p36 = por %p34, %p35
      %p37 = scmp.ne.s32.totalorder %s23, %s24
      %p38 = scmp.eq.s32.totalorder %s16, 1
      %p39 = por %p37, %p38
      %p41 = scmp.ne.s32.totalorder %s24, %s40
      %p42 = scmp.eq.s32.totalorder %s16, 0
      %p43 = por %p41, %p42
      %s44 = ssub.s32 %s10, %s17
      %p45 = scmp.eq.s32.totalorder %s44, 0
      %s47 = sadd.s32 %s46, 1
      %s48 = scalar_select %p45, %s46, %s47
      %p51 = pneg %p45
      %p52 = scmp.eq.s32.totalorder %s10, 1
      %p53 = por %p51, %p52
      %p54 = scmp.ne.s32.totalorder %s46, %s49
      %p55 = scmp.eq.s32.totalorder %s10, 0
      %p56 = por %p54, %p55
      %p57 = scmp.ne.s32.totalorder %s46, %s49
      %p58 = scmp.eq.s32.totalorder %s15, 1
      %p59 = por %p57, %p58
      %p60 = scmp.ne.s32.totalorder %s49, %s50
      %p61 = scmp.eq.s32.totalorder %s15, 0
      %p62 = por %p60, %p61
      %p63 = scmp.ne.s32.totalorder %s49, %s50
      %p64 = scmp.eq.s32.totalorder %s16, 1
      %p65 = por %p63, %p64
      %p67 = scmp.ne.s32.totalorder %s50, %s66
      %p68 = scmp.eq.s32.totalorder %s16, 0
      %p69 = por %p67, %p68
      %p70 = scmp.le.s32.totalorder 1, %s10
      %p71 = scmp.lt.s32.totalorder %s10, 3
      %p72 = pnand %p70, %p71
      %p73 = pneg %p72
      // Predicated region
      $region9: #{tpu_custom_call.1} parent=5 // pred_check
        _
      $region10: #{tpu_custom_call.1} parent=5 // pred_check_branch
        %75 = sbr.rel (%p72) target = $region12
      $region11: #{tpu_custom_call.1} parent=5 // pred_region
        %s76 = ssub.s32 %s10, 1
      $region12: #{tpu_custom_call.1} parent=5 // pred_fallthru
        _
      %p77 = scmp.lt.s32.totalorder %s10, 2
      // Predicated region
      $region13: #{tpu_custom_call.1} parent=5 // pred_check
        %p78 = pneg %p77
      $region14: #{tpu_custom_call.1} parent=5 // pred_check_branch
        %80 = sbr.rel (%p78) target = $region16
      $region15: #{tpu_custom_call.1} parent=5 // pred_region
        // Predicated region
        $region17: #{tpu_custom_call.1} parent=15 // pred_check
          %p81 = pneg %p30
        $region18: #{tpu_custom_call.1} parent=15 // pred_check_branch
          %83 = sbr.rel (%p81) target = $region20
        $region19: #{tpu_custom_call.1} parent=15 // pred_region
          %p84 = scmp.lt.s32.totalorder %s10, 1
          %s85 = scalar_select %p84, %s10, 1
          %s86 = smul.addr %s85, 2
          %s87 = smul.addr %s86, 8
          %s88 = scalar_lea.vmem %s0, %s87
        $region20: #{tpu_custom_call.1} parent=15 // pred_fallthru
          _
      $region16: #{tpu_custom_call.1} parent=5 // pred_fallthru
        _
      %p89 = scmp.le.s32.totalorder 1, %s10
      %p90 = scmp.lt.s32.totalorder %s10, 3
      %p91 = pnand %p89, %p90
      %p92 = pneg %p91
      // Predicated region
      $region21: #{tpu_custom_call.1} parent=5 // pred_check
        _
      $region22: #{tpu_custom_call.1} parent=5 // pred_check_branch
        %94 = sbr.rel (%p91) target = $region24
      $region23: #{tpu_custom_call.1} parent=5 // pred_region
        %s95 = ssub.s32 %s10, 1
        %p96 = scmp.lt.s32.totalorder %s15, 1
        %s97 = scalar_select %p96, %s15, 1
        %s98 = smul.addr %s97, 2
        %s99 = smul.addr %s98, 8
        %s100 = scalar_lea.vmem %s0, %s99
        %p101 = pneg %p36
        %p102 = pneg %p33
        %p103 = pneg %p62
        %p104 = pneg %p59
        %s105 = sand.u32 %s49, 1
        %s106 = scalar_lea.sflag [#allocation3], %s105
        %s107 = sand.u32 %s49, 1
        %s108 = smul.addr %s107, 4
        %s109 = scalar_lea.vmem [#allocation2], %s108
        %p110 = scmp.lt.s32.totalorder %s15, 1
        %s111 = scalar_select %p110, %s15, 1
        %s112 = smul.addr %s111, 2
        %s113 = smul.addr %s112, 8
        %s114 = scalar_lea.vmem %s0, %s113
        %v115 = vld [vmem:[%s114] sm:$0xff]
        %v116 = vld [vmem:[%s114 + $0x8] sm:$0xff]
        %117 = vxpose.xlu0.b32.start [1/16] %v115, 128
        %118 = vxpose.xlu0.b32.cont [2/16] %v116, 128
        %119 = vxpose.xlu0.b32.cont [3/16] 0.0, 128
        %120 = vxpose.xlu0.b32.cont [4/16] 0.0, 128
        %121 = vxpose.xlu0.b32.cont [5/16] 0.0, 128
        %122 = vxpose.xlu0.b32.cont [6/16] 0.0, 128
        %123 = vxpose.xlu0.b32.cont [7/16] 0.0, 128
        %124 = vxpose.xlu0.b32.cont [8/16] 0.0, 128
        %125 = vxpose.xlu0.b32.cont [9/16] 0.0, 128
        %126 = vxpose.xlu0.b32.cont [10/16] 0.0, 128
        %127 = vxpose.xlu0.b32.cont [11/16] 0.0, 128
        %128 = vxpose.xlu0.b32.cont [12/16] 0.0, 128
        %129 = vxpose.xlu0.b32.cont [13/16] 0.0, 128
        %130 = vxpose.xlu0.b32.cont [14/16] 0.0, 128
        %131 = vxpose.xlu0.b32.cont [15/16] 0.0, 128
        %132 = vxpose.xlu0.b32.end [16/16] 0.0, 128
        %v133 = vpop.trf.xlu0
        %v134 = vpop.trf.xlu0
        %v135 = vpop.trf.xlu0
        %v136 = vpop.trf.xlu0
        %v137 = vpop.trf.xlu0
        %v138 = vpop.trf.xlu0
        %v139 = vpop.trf.xlu0
        %v140 = vpop.trf.xlu0
        %v141 = vpop.trf.xlu0
        %v142 = vpop.trf.xlu0
        %v143 = vpop.trf.xlu0
        %v144 = vpop.trf.xlu0
        %v145 = vpop.trf.xlu0
        %v146 = vpop.trf.xlu0
        %v147 = vpop.trf.xlu0
        %v148 = vpop.trf.xlu0
        %150 = vset.pattern.permute.xlu0 15
        %151 = vperm.xlu0 %150, %v133
        %v152 = vpop.permute.xlu0 %151
        %vm154 = vcmask 130048
        %v155 = vsel %vm154, %v133, %v152
        %157 = vrot.lane.b32.xlu0 %v155, 124
        %v158 = vpop.permute.xlu0 %157
        %160 = vrot.lane.b32.xlu0 %v155, 120
        %v161 = vpop.permute.xlu0 %160
        %163 = vrot.lane.b32.xlu0 %v155, 116
        %v164 = vpop.permute.xlu0 %163
        %166 = vrot.lane.b32.xlu0 %v155, 112
        %v167 = vpop.permute.xlu0 %166
        %v168 = vcombine.low %v155, %v161
        %v170 = vunpack.c.l.s4 1983009808
        %v171 = vunpack.c.0.s8 %v170
        %v172 = vlaneseq
        %v173 = vshrl.u32 %v172, 7
        %v174 = vsub.s32 %v171, %v173
        %v175 = vrot.slane %v168, %v174
        %v176 = vcombine.low %v158, %v164
        %v178 = vunpack.c.l.s4 1983009808
        %v179 = vunpack.c.0.s8 %v178
        %v180 = vlaneseq
        %v181 = vshrl.u32 %v180, 7
        %v182 = vsub.s32 %v179, %v181
        %v183 = vrot.slane %v176, %v182
        %v186 = vunpack.c.l.s4 1983009808
        %v187 = vunpack.c.0.s8 %v186
        %v188 = vlaneseq
        %v189 = vshrl.u32 %v188, 7
        %v190 = vsub.s32 %v187, %v189
        %v191 = vrot.slane %v167, %v190
        %v192 = vcombine.low %v175, %v183
        %v193 = vcombine.high %v175, %v183
        %v195 = vunpack.c.l.s4 1934713408
        %v196 = vunpack.c.0.s8 %v195
        %v197 = vlaneseq
        %v198 = vshrl.u32 %v197, 7
        %v199 = vsub.s32 %v196, %v198
        %v200 = vrot.slane %v192, %v199
        %v202 = vunpack.c.l.s4 1934713408
        %v203 = vunpack.c.0.s8 %v202
        %v204 = vlaneseq
        %v205 = vshrl.u32 %v204, 7
        %v206 = vsub.s32 %v203, %v205
        %v207 = vrot.slane %v193, %v206
        %v208 = vcombine.high %v191, 0.0
        %v210 = vunpack.c.l.s4 1934713408
        %v211 = vunpack.c.0.s8 %v210
        %v212 = vlaneseq
        %v213 = vshrl.u32 %v212, 7
        %v214 = vsub.s32 %v211, %v213
        %v215 = vrot.slane %v191, %v214
        %v217 = vunpack.c.l.s4 1934713408
        %v218 = vunpack.c.0.s8 %v217
        %v219 = vlaneseq
        %v220 = vshrl.u32 %v219, 7
        %v221 = vsub.s32 %v218, %v220
        %v222 = vrot.slane %v208, %v221
        %v223 = vcombine.low %v200, %v215
        %v224 = vcombine.high %v200, %v215
        %v225 = vcombine.low %v207, %v222
        %v226 = vcombine.high %v207, %v222
        %v231 = vrot.slane %v223, 1
        %v232 = vrot.slane %v224, 1
        %v233 = vrot.slane %v225, 1
        %v234 = vrot.slane %v226, 1
        %235 = vrot.lane.b32.xlu0 %v231, 4
        %v236 = vpop.permute.xlu0 %235
        %237 = vrot.lane.b32.xlu0 %v232, 4
        %v238 = vpop.permute.xlu0 %237
        %239 = vrot.lane.b32.xlu0 %v233, 4
        %v240 = vpop.permute.xlu0 %239
        %241 = vrot.lane.b32.xlu0 %v234, 4
        %v242 = vpop.permute.xlu0 %241
        %vm247 = vcmask 31744
        %v248 = vsel %vm247, %v223, %v236
        %v249 = vsel %vm247, %v224, %v238
        %v250 = vsel %vm247, %v225, %v240
        %v251 = vsel %vm247, %v226, %v242
        %v252 = vcombine.low %v248, %v250
        %v254 = vunpack.c.l.s4 1983009808
        %v255 = vunpack.c.0.s8 %v254
        %v256 = vlaneseq
        %v257 = vshrl.u32 %v256, 7
        %v258 = vsub.s32 %v255, %v257
        %v259 = vrot.slane %v252, %v258
        %v260 = vcombine.low %v249, %v251
        %v262 = vunpack.c.l.s4 1983009808
        %v263 = vunpack.c.0.s8 %v262
        %v264 = vlaneseq
        %v265 = vshrl.u32 %v264, 7
        %v266 = vsub.s32 %v263, %v265
        %v267 = vrot.slane %v260, %v266
        %v268 = vcombine.low %v259, %v267
        %v269 = vcombine.high %v259, %v267
        %v271 = vunpack.c.l.s4 1934713408
        %v272 = vunpack.c.0.s8 %v271
        %v273 = vlaneseq
        %v274 = vshrl.u32 %v273, 7
        %v275 = vsub.s32 %v272, %v274
        %v276 = vrot.slane %v268, %v275
        %v278 = vunpack.c.l.s4 1934713408
        %v279 = vunpack.c.0.s8 %v278
        %v280 = vlaneseq
        %v281 = vshrl.u32 %v280, 7
        %v282 = vsub.s32 %v279, %v281
        %v283 = vrot.slane %v269, %v282
        %v284 = vcombine.high %v276, 0.0
        %v285 = vcombine.high %v283, 0.0
        %287 = vrot.lane.b32.xlu0 %v284, 8
        %v288 = vpop.permute.xlu0 %287
        %291 = vrot.lane.b32.xlu0 %v283, 16
        %v292 = vpop.permute.xlu0 %291
        %295 = vrot.lane.b32.xlu0 %v285, 24
        %v296 = vpop.permute.xlu0 %295
        %vm298 = vcmask 64512
        %v299 = vsel %vm298, %v276, %v288
        %v300 = vsel %vm154, %v299, %v292
        %vm301 = vcmask 195584
        %v302 = vsel %vm301, %v300, %v296
        %vm303 = vcmask 257024
        %304 = vst.msk [vmem:[%s109] sm:$0xf] %vm303, %v302
        %s305 = sand.u32 %s49, 1
        %s306 = scalar_lea.sflag [#allocation3], %s305
        %s307 = sand.u32 %s49, 1
        %s308 = smul.addr %s307, 4
        %s309 = scalar_lea.vmem [#allocation2], %s308
        // Predicated region
        $region25: #{tpu_custom_call.1} parent=23 // pred_check
          %p310 = pneg %p59
        $region26: #{tpu_custom_call.1} parent=23 // pred_check_branch
          %312 = sbr.rel (%p310) target = $region28
        $region27: #{tpu_custom_call.1} parent=23 // pred_region
          %s314 = ssub.s32 64, 64
          %315 = vsyncadd %s306, %s314
          %s316 = smul.addr %s15, 64
          %s317 = scalar_lea.hbm %s1, %s316
          %s319 = sshll.u32 %s309, 4
          %s320 = int_to_ptr.vmem [resolvable:$true] %s319
          %322 = dma.vmem_to_hbm [thread:$0]  %s320, 64, %s317, %s306
        $region28: #{tpu_custom_call.1} parent=23 // pred_fallthru
          _
      $region24: #{tpu_custom_call.1} parent=5 // pred_fallthru
        _
      %p323 = scmp.le.s32.totalorder 2, %s10
      // Predicated region
      $region29: #{tpu_custom_call.1} parent=5 // pred_check
        %p324 = pneg %p323
      $region30: #{tpu_custom_call.1} parent=5 // pred_check_branch
        %326 = sbr.rel (%p324) target = $region32
      $region31: #{tpu_custom_call.1} parent=5 // pred_region
        %s327 = ssub.s32 %s10, 2
        // Predicated region
        $region33: #{tpu_custom_call.1} parent=31 // pred_check
          %p328 = pneg %p65
        $region34: #{tpu_custom_call.1} parent=31 // pred_check_branch
          %330 = sbr.rel (%p328) target = $region36
        $region35: #{tpu_custom_call.1} parent=31 // pred_region
          %s331 = sand.u32 %s50, 1
          %s332 = scalar_lea.sflag [#allocation3], %s331
          %s333 = sand.u32 %s50, 1
          %s334 = smul.addr %s333, 4
          %s335 = scalar_lea.vmem [#allocation2], %s334
          %336 = dma.done %s332, 64
        $region36: #{tpu_custom_call.1} parent=31 // pred_fallthru
          _
      $region32: #{tpu_custom_call.1} parent=5 // pred_fallthru
        _
    $region6: #{tpu_custom_call.1} parent=1 // loop_footer
      %s14 = sadd.s32 1, %s10
    $region7: #{tpu_custom_call.1} parent=1 // loop_footer_branch
      %9 = sbr.rel target = $region3
    $region8: #{tpu_custom_call.1} parent=1 // loop_exit
      _
    %337 = vsyncpa [#allocation3], 1
    %s338 = scalar_lea.sflag [#allocation3], 1
    %339 = vsyncpa %s338, 1

</llo_original>
